<compile_context>
chip_gen: v5e
topology: v5e:2x2
jax: 0.10.0
libtpu: 0.0.40
codegen_flags: <defaults>
</compile_context>

<pallas_src>
import functools

import jax
import jax.numpy as jnp
from jax.experimental import pallas as pl
from jax.experimental.pallas import tpu as pltpu

LANE = 128  # lane-dense output width


# ---------------------------------------------------------------------------
# Fused Pallas kernel: encoder MLP + pair build + head MLP for one batch tile
# ---------------------------------------------------------------------------

def _idm_fused_kernel(nobs_ref,
                      ew1_ref, eb1_ref, ew2_ref, eb2_ref,
                      hw1c_ref, hw1n_ref, hb1_ref, hw2_ref, hb2_ref,
                      out_ref):
    """encoder:  z   = relu(obs @ EW1 + eb1) @ EW2 + eb2          (per frame)
       pairs:    (z_t, z_{t+1}) built in VMEM via a row shift of z
       head:     act = tanh(relu(z_t @ HW1c + z_{t+1} @ HW1n + hb1) @ HW2 + hb2)
       output:   one packed 128-lane slab: lanes [0:latent] = z,
                 lanes [latent:latent+act_dim] = tanh(action)."""
    bb, T, D = nobs_ref.shape
    rows = bb * T

    # ---- encoder MLP (bf16 MXU inputs, f32 accumulation) -------------------
    obs = nobs_ref[...].reshape(rows, D)                   # already bf16
    h = jnp.dot(obs, ew1_ref[...], preferred_element_type=jnp.float32)
    h = jnp.maximum(h + eb1_ref[...], 0.0)
    z = jnp.dot(h.astype(jnp.bfloat16), ew2_ref[...],
                preferred_element_type=jnp.float32) + eb2_ref[...]
    # z lanes [latent:128] are exactly zero (enc_w2 / enc_b2 zero-padded).

    # ---- consecutive-frame pairs, built in VMEM (no HBM round-trip) --------
    # Row r pairs with row r+1; rows at t == T-1 pair with a garbage partner
    # (next batch's frame 0 / tile wrap) and are sliced off in the wrapper.
    z_next = jnp.concatenate([z[1:, :], z[:1, :]], axis=0)

    # ---- head MLP (Linear(2*latent, hidden) split into z_t / z_{t+1} halves
    #      so no 256-lane concat is materialized) ----------------------------
    h2 = (jnp.dot(z.astype(jnp.bfloat16), hw1c_ref[...],
                  preferred_element_type=jnp.float32)
          + jnp.dot(z_next.astype(jnp.bfloat16), hw1n_ref[...],
                    preferred_element_type=jnp.float32)
          + hb1_ref[...])
    h2 = jnp.maximum(h2, 0.0)
    a = jnp.dot(h2.astype(jnp.bfloat16), hw2_ref[...],
                preferred_element_type=jnp.float32) + hb2_ref[...]
    # a is exactly zero outside lanes [latent:latent+act_dim] (head_w2/head_b2
    # zero-padded there), so tanh(a) is zero there and the sum needs no mask.

    out = z + jnp.tanh(a)
    out_ref[...] = out.reshape(bb, T, LANE).astype(out_ref.dtype)


# ---------------------------------------------------------------------------
# Parameter setup (deterministic, in-script)
# ---------------------------------------------------------------------------

def init_params(key, obs_dim, hidden, latent, act_dim):
    """Returns (kernel_params, raw_params).

    kernel_params: bf16 MXU weights / f32 biases, zero-padded to 128 output
    lanes.  enc_w2/enc_b2 land the latent in lanes [0:latent]; head_w2/head_b2
    land the action in lanes [latent:latent+act_dim] so both outputs pack into
    one lane-dense slab.  The head's Linear(2*latent, hidden) is stored as two
    (128, hidden) halves (z_t half, z_{t+1} half).
    raw_params: the original f32 weights, used only by the reference."""
    assert latent + act_dim <= LANE, "latent + act_dim must fit in 128 lanes"
    ks = jax.random.split(key, 8)

    def lin(kw, kb, fan_in, fan_out):
        bound = 1.0 / (fan_in ** 0.5)
        w = jax.random.uniform(kw, (fan_in, fan_out), jnp.float32, -bound, bound)
        b = jax.random.uniform(kb, (1, fan_out), jnp.float32, -bound, bound)
        return w, b

    enc_w1, enc_b1 = lin(ks[0], ks[1], obs_dim, hidden)
    enc_w2, enc_b2 = lin(ks[2], ks[3], hidden, latent)
    head_w1, head_b1 = lin(ks[4], ks[5], 2 * latent, hidden)
    head_w2, head_b2 = lin(ks[6], ks[7], hidden, act_dim)

    raw = dict(enc_w1=enc_w1, enc_b1=enc_b1, enc_w2=enc_w2, enc_b2=enc_b2,
               head_w1=head_w1, head_b1=head_b1, head_w2=head_w2, head_b2=head_b2)

    def pad_cols(w, width, col0=0):
        out = jnp.zeros((w.shape[0], width), jnp.float32)
        return out.at[:, col0:col0 + w.shape[1]].set(w)

    def pad_rows(w, height):
        out = jnp.zeros((height, w.shape[1]), jnp.float32)
        return out.at[: w.shape[0], :].set(w)

    kparams = dict(
        enc_w1=enc_w1.astype(jnp.bfloat16),
        enc_b1=enc_b1,
        enc_w2=pad_cols(enc_w2, LANE).astype(jnp.bfloat16),
        enc_b2=pad_cols(enc_b2, LANE),
        head_w1_cur=pad_rows(head_w1[:latent, :], LANE).astype(jnp.bfloat16),
        head_w1_nxt=pad_rows(head_w1[latent:, :], LANE).astype(jnp.bfloat16),
        head_b1=head_b1,
        head_w2=pad_cols(head_w2, LANE, col0=latent).astype(jnp.bfloat16),
        head_b2=pad_cols(head_b2, LANE, col0=latent),
    )
    return kparams, raw


# ---------------------------------------------------------------------------
# Forward pass:  (x, act) = idm_cotrain_policy(nobs)
# ---------------------------------------------------------------------------

def idm_cotrain_forward(params, nobs, *, latent, act_dim, max_rows_per_tile=2048):
    B, T, D = nobs.shape

    # rows per grid step: large tiles amortize the ~0.35 us per-step overhead;
    # cap so the grid has >= 2 steps whenever B >= 2 (v7x has 2 TensorCores).
    bb = max(1, min(max_rows_per_tile // max(T, 1), B))
    if B >= 2:
        bb = min(bb, pl.cdiv(B, 2))
    grid_b = pl.cdiv(B, bb)
    B_pad = grid_b * bb

    # half-width input DMA; pad B so the grid never degenerates (outputs are
    # sliced back below, so the padded rows are never observed).
    nobs_bf = nobs.astype(jnp.bfloat16)
    if B_pad != B:
        nobs_bf = jnp.pad(nobs_bf, ((0, B_pad - B), (0, 0), (0, 0)))

    # weights: full-array blocks, constant index_map -> VMEM-resident
    resident = lambda a: pl.BlockSpec(a.shape, lambda i: (0,) * a.ndim)
    weight_names = ("enc_w1", "enc_b1", "enc_w2", "enc_b2",
                    "head_w1_cur", "head_w1_nxt", "head_b1", "head_w2", "head_b2")
    weights = tuple(params[n] for n in weight_names)

    out = pl.pallas_call(
        _idm_fused_kernel,
        out_shape=jax.ShapeDtypeStruct((B_pad, T, LANE), jnp.float32),
        grid=(grid_b,),
        in_specs=[pl.BlockSpec((bb, T, D), lambda i: (i, 0, 0))]
                 + [resident(w) for w in weights],
        out_specs=pl.BlockSpec((bb, T, LANE), lambda i: (i, 0, 0)),
        compiler_params=pltpu.CompilerParams(
            dimension_semantics=("parallel",),
            vmem_limit_bytes=48 * 1024 * 1024,
        ),
    )(nobs_bf, *weights)

    x = out[:B, :, :latent]                           # [B, T, latent]
    act = out[:B, : T - 1, latent:latent + act_dim]   # [B, T-1, act_dim]
    return x, act


# ---------------------------------------------------------------------------
# Independent pure-f32 reference (raw, un-padded weights) for correctness
# ---------------------------------------------------------------------------

def _ref_forward_f32(raw, nobs):
    hi = jax.lax.Precision.HIGHEST
    B, T, D = nobs.shape
    obs = nobs.reshape(B * T, D)
    h = jnp.maximum(jnp.dot(obs, raw["enc_w1"], precision=hi) + raw["enc_b1"], 0.0)
    z = (jnp.dot(h, raw["enc_w2"], precision=hi) + raw["enc_b2"]).reshape(B, T, -1)
    pair = jnp.concatenate([z[:, :-1, :], z[:, 1:, :]], axis=-1)
    pair = pair.reshape(B * (T - 1), -1)
    h2 = jnp.maximum(jnp.dot(pair, raw["head_w1"], precision=hi) + raw["head_b1"], 0.0)
    a = jnp.tanh(jnp.dot(h2, raw["head_w2"], precision=hi) + raw["head_b2"])
    return z, a.reshape(B, T - 1, -1)


# ---------------------------------------------------------------------------
if __name__ == "__main__":
    B, T, OBS_DIM = 2, 8, 32
    HIDDEN, LATENT, ACT_DIM = 64, 64, 8

    key = jax.random.PRNGKey(0)
    k_params, k_obs = jax.random.split(key)
    params, raw = init_params(k_params, OBS_DIM, HIDDEN, LATENT, ACT_DIM)
    nobs = jax.random.normal(k_obs, (B, T, OBS_DIM), jnp.float32)

    fwd = jax.jit(functools.partial(idm_cotrain_forward,
                                    latent=LATENT, act_dim=ACT_DIM))
    x, act = fwd(params, nobs)
    jax.block_until_ready((x, act))

    assert x.shape == (B, T, LATENT)
    assert act.shape == (B, T - 1, ACT_DIM)
    assert bool(jnp.all(jnp.isfinite(x))) and bool(jnp.all(jnp.isfinite(act)))

    # compare against an independent f32 reference; tolerance covers bf16 MXU
    # rounding but catches structural errors (swapped pair halves, bad lanes).
    x_ref, act_ref = _ref_forward_f32(raw, nobs)
    assert bool(jnp.allclose(x, x_ref, atol=4e-2, rtol=4e-2)), "x mismatch vs f32 reference"
    assert bool(jnp.allclose(act, act_ref, atol=4e-2, rtol=4e-2)), "act mismatch vs f32 reference"

    print("KERNEL_OK")
</pallas_src>

<mosaic_0001>
module attributes {stable_mosaic.version = 11 : i64} {
  func.func @_idm_fused_kernel(%arg0: i32, %arg1: memref<1x8x32xbf16, #tpu.memory_space<vmem>>, %arg2: memref<32x64xbf16, #tpu.memory_space<vmem>>, %arg3: memref<1x64xf32, #tpu.memory_space<vmem>>, %arg4: memref<64x128xbf16, #tpu.memory_space<vmem>>, %arg5: memref<1x128xf32, #tpu.memory_space<vmem>>, %arg6: memref<128x64xbf16, #tpu.memory_space<vmem>>, %arg7: memref<128x64xbf16, #tpu.memory_space<vmem>>, %arg8: memref<1x64xf32, #tpu.memory_space<vmem>>, %arg9: memref<64x128xbf16, #tpu.memory_space<vmem>>, %arg10: memref<1x128xf32, #tpu.memory_space<vmem>>, %arg11: memref<1x8x128xf32, #tpu.memory_space<vmem>>) attributes {dimension_semantics = [#tpu.dimension_semantics<parallel>], iteration_bounds = array<i64: 2>, scalar_prefetch = 0 : i64, scratch_operands = 0 : i64, tpu.core_type = #tpu.core_type<tc>, window_params = [{transform_indices = @transform_0, window_bounds = array<i64: 1, 8, 32>}, {pipeline_mode = #tpu.pipeline_mode<synchronous>, transform_indices = @transform_1, window_bounds = array<i64: 32, 64>}, {pipeline_mode = #tpu.pipeline_mode<synchronous>, transform_indices = @transform_2, window_bounds = array<i64: 1, 64>}, {pipeline_mode = #tpu.pipeline_mode<synchronous>, transform_indices = @transform_3, window_bounds = array<i64: 64, 128>}, {pipeline_mode = #tpu.pipeline_mode<synchronous>, transform_indices = @transform_4, window_bounds = array<i64: 1, 128>}, {pipeline_mode = #tpu.pipeline_mode<synchronous>, transform_indices = @transform_5, window_bounds = array<i64: 128, 64>}, {pipeline_mode = #tpu.pipeline_mode<synchronous>, transform_indices = @transform_6, window_bounds = array<i64: 128, 64>}, {pipeline_mode = #tpu.pipeline_mode<synchronous>, transform_indices = @transform_7, window_bounds = array<i64: 1, 64>}, {pipeline_mode = #tpu.pipeline_mode<synchronous>, transform_indices = @transform_8, window_bounds = array<i64: 64, 128>}, {pipeline_mode = #tpu.pipeline_mode<synchronous>, transform_indices = @transform_9, window_bounds = array<i64: 1, 128>}, {transform_indices = @transform_10, window_bounds = array<i64: 1, 8, 128>}]} {
    %c0 = arith.constant 0 : index
    %c0_0 = arith.constant 0 : index
    %c0_1 = arith.constant 0 : index
    %0 = vector.load %arg1[%c0, %c0_0, %c0_1] : memref<1x8x32xbf16, #tpu.memory_space<vmem>>, vector<1x8x32xbf16>
    %1 = vector.shape_cast %0 : vector<1x8x32xbf16> to vector<8x32xbf16>
    %c0_2 = arith.constant 0 : index
    %c0_3 = arith.constant 0 : index
    %2 = vector.load %arg2[%c0_2, %c0_3] : memref<32x64xbf16, #tpu.memory_space<vmem>>, vector<32x64xbf16>
    %cst = arith.constant dense<0.000000e+00> : vector<8x64xf32>
    %3 = tpu.matmul %1, %2, %cst {dimension_numbers = #tpu.dot_dimension_numbers<[1], [0], [0], [1], [0, 0, 1, 1], [], []>} : vector<8x32xbf16>, vector<32x64xbf16>, vector<8x64xf32> -> vector<8x64xf32>
    %c0_4 = arith.constant 0 : index
    %c0_5 = arith.constant 0 : index
    %4 = vector.load %arg3[%c0_4, %c0_5] : memref<1x64xf32, #tpu.memory_space<vmem>>, vector<1x64xf32>
    %5 = vector.broadcast %4 : vector<1x64xf32> to vector<8x64xf32>
    %6 = arith.addf %3, %5 : vector<8x64xf32>
    %cst_6 = arith.constant 0.000000e+00 : f32
    %7 = vector.broadcast %cst_6 : f32 to vector<8x64xf32>
    %8 = arith.maximumf %6, %7 : vector<8x64xf32>
    %9 = arith.truncf %8 : vector<8x64xf32> to vector<8x64xbf16>
    %c0_7 = arith.constant 0 : index
    %c0_8 = arith.constant 0 : index
    %10 = vector.load %arg4[%c0_7, %c0_8] : memref<64x128xbf16, #tpu.memory_space<vmem>>, vector<64x128xbf16>
    %cst_9 = arith.constant dense<0.000000e+00> : vector<8x128xf32>
    %11 = tpu.matmul %9, %10, %cst_9 {dimension_numbers = #tpu.dot_dimension_numbers<[1], [0], [0], [1], [0, 0, 1, 1], [], []>} : vector<8x64xbf16>, vector<64x128xbf16>, vector<8x128xf32> -> vector<8x128xf32>
    %c0_10 = arith.constant 0 : index
    %c0_11 = arith.constant 0 : index
    %12 = vector.load %arg5[%c0_10, %c0_11] : memref<1x128xf32, #tpu.memory_space<vmem>>, vector<1x128xf32>
    %13 = vector.broadcast %12 : vector<1x128xf32> to vector<8x128xf32>
    %14 = arith.addf %11, %13 : vector<8x128xf32>
    %15 = vector.extract_strided_slice %14 {offsets = [1, 0], sizes = [7, 128], strides = [1, 1]} : vector<8x128xf32> to vector<7x128xf32>
    %16 = vector.extract_strided_slice %14 {offsets = [0, 0], sizes = [1, 128], strides = [1, 1]} : vector<8x128xf32> to vector<1x128xf32>
    %17 = tpu.concatenate %15, %16 in 0 : vector<7x128xf32>, vector<1x128xf32> -> vector<8x128xf32>
    %18 = arith.truncf %14 : vector<8x128xf32> to vector<8x128xbf16>
    %c0_12 = arith.constant 0 : index
    %c0_13 = arith.constant 0 : index
    %19 = vector.load %arg6[%c0_12, %c0_13] : memref<128x64xbf16, #tpu.memory_space<vmem>>, vector<128x64xbf16>
    %cst_14 = arith.constant dense<0.000000e+00> : vector<8x64xf32>
    %20 = tpu.matmul %18, %19, %cst_14 {dimension_numbers = #tpu.dot_dimension_numbers<[1], [0], [0], [1], [0, 0, 1, 1], [], []>} : vector<8x128xbf16>, vector<128x64xbf16>, vector<8x64xf32> -> vector<8x64xf32>
    %21 = arith.truncf %17 : vector<8x128xf32> to vector<8x128xbf16>
    %c0_15 = arith.constant 0 : index
    %c0_16 = arith.constant 0 : index
    %22 = vector.load %arg7[%c0_15, %c0_16] : memref<128x64xbf16, #tpu.memory_space<vmem>>, vector<128x64xbf16>
    %cst_17 = arith.constant dense<0.000000e+00> : vector<8x64xf32>
    %23 = tpu.matmul %21, %22, %cst_17 {dimension_numbers = #tpu.dot_dimension_numbers<[1], [0], [0], [1], [0, 0, 1, 1], [], []>} : vector<8x128xbf16>, vector<128x64xbf16>, vector<8x64xf32> -> vector<8x64xf32>
    %24 = arith.addf %20, %23 : vector<8x64xf32>
    %c0_18 = arith.constant 0 : index
    %c0_19 = arith.constant 0 : index
    %25 = vector.load %arg8[%c0_18, %c0_19] : memref<1x64xf32, #tpu.memory_space<vmem>>, vector<1x64xf32>
    %26 = vector.broadcast %25 : vector<1x64xf32> to vector<8x64xf32>
    %27 = arith.addf %24, %26 : vector<8x64xf32>
    %cst_20 = arith.constant 0.000000e+00 : f32
    %28 = vector.broadcast %cst_20 : f32 to vector<8x64xf32>
    %29 = arith.maximumf %27, %28 : vector<8x64xf32>
    %30 = arith.truncf %29 : vector<8x64xf32> to vector<8x64xbf16>
    %c0_21 = arith.constant 0 : index
    %c0_22 = arith.constant 0 : index
    %31 = vector.load %arg9[%c0_21, %c0_22] : memref<64x128xbf16, #tpu.memory_space<vmem>>, vector<64x128xbf16>
    %cst_23 = arith.constant dense<0.000000e+00> : vector<8x128xf32>
    %32 = tpu.matmul %30, %31, %cst_23 {dimension_numbers = #tpu.dot_dimension_numbers<[1], [0], [0], [1], [0, 0, 1, 1], [], []>} : vector<8x64xbf16>, vector<64x128xbf16>, vector<8x128xf32> -> vector<8x128xf32>
    %c0_24 = arith.constant 0 : index
    %c0_25 = arith.constant 0 : index
    %33 = vector.load %arg10[%c0_24, %c0_25] : memref<1x128xf32, #tpu.memory_space<vmem>>, vector<1x128xf32>
    %34 = vector.broadcast %33 : vector<1x128xf32> to vector<8x128xf32>
    %35 = arith.addf %32, %34 : vector<8x128xf32>
    %36 = math.tanh %35 : vector<8x128xf32>
    %37 = arith.addf %14, %36 : vector<8x128xf32>
    %38 = vector.shape_cast %37 : vector<8x128xf32> to vector<1x8x128xf32>
    %c0_26 = arith.constant 0 : index
    %c0_27 = arith.constant 0 : index
    %c0_28 = arith.constant 0 : index
    %39 = vector.load %arg11[%c0_26, %c0_27, %c0_28] : memref<1x8x128xf32, #tpu.memory_space<vmem>>, vector<1x8x128xf32>
    tpu.vector_store %arg11[%c0_26, %c0_27, %c0_28], %38 {strides = array<i32>} : memref<1x8x128xf32, #tpu.memory_space<vmem>>, vector<1x8x128xf32>,
    return
  }
  func.func @transform_0(%arg0: i32) -> (i32, i32, i32) {
    %c0_i32 = arith.constant 0 : i32
    %c0_i32_0 = arith.constant 0 : i32
    %c0_i32_1 = arith.constant 0 : i32
    return %arg0, %c0_i32, %c0_i32_0 : i32, i32, i32
  }
  func.func @transform_1(%arg0: i32) -> (i32, i32) {
    %c0_i32 = arith.constant 0 : i32
    %c0_i32_0 = arith.constant 0 : i32
    %c0_i32_1 = arith.constant 0 : i32
    return %c0_i32, %c0_i32_0 : i32, i32
  }
  func.func @transform_2(%arg0: i32) -> (i32, i32) {
    %c0_i32 = arith.constant 0 : i32
    %c0_i32_0 = arith.constant 0 : i32
    %c0_i32_1 = arith.constant 0 : i32
    return %c0_i32, %c0_i32_0 : i32, i32
  }
  func.func @transform_3(%arg0: i32) -> (i32, i32) {
    %c0_i32 = arith.constant 0 : i32
    %c0_i32_0 = arith.constant 0 : i32
    %c0_i32_1 = arith.constant 0 : i32
    return %c0_i32, %c0_i32_0 : i32, i32
  }
  func.func @transform_4(%arg0: i32) -> (i32, i32) {
    %c0_i32 = arith.constant 0 : i32
    %c0_i32_0 = arith.constant 0 : i32
    %c0_i32_1 = arith.constant 0 : i32
    return %c0_i32, %c0_i32_0 : i32, i32
  }
  func.func @transform_5(%arg0: i32) -> (i32, i32) {
    %c0_i32 = arith.constant 0 : i32
    %c0_i32_0 = arith.constant 0 : i32
    %c0_i32_1 = arith.constant 0 : i32
    return %c0_i32, %c0_i32_0 : i32, i32
  }
  func.func @transform_6(%arg0: i32) -> (i32, i32) {
    %c0_i32 = arith.constant 0 : i32
    %c0_i32_0 = arith.constant 0 : i32
    %c0_i32_1 = arith.constant 0 : i32
    return %c0_i32, %c0_i32_0 : i32, i32
  }
  func.func @transform_7(%arg0: i32) -> (i32, i32) {
    %c0_i32 = arith.constant 0 : i32
    %c0_i32_0 = arith.constant 0 : i32
    %c0_i32_1 = arith.constant 0 : i32
    return %c0_i32, %c0_i32_0 : i32, i32
  }
  func.func @transform_8(%arg0: i32) -> (i32, i32) {
    %c0_i32 = arith.constant 0 : i32
    %c0_i32_0 = arith.constant 0 : i32
    %c0_i32_1 = arith.constant 0 : i32
    return %c0_i32, %c0_i32_0 : i32, i32
  }
  func.func @transform_9(%arg0: i32) -> (i32, i32) {
    %c0_i32 = arith.constant 0 : i32
    %c0_i32_0 = arith.constant 0 : i32
    %c0_i32_1 = arith.constant 0 : i32
    return %c0_i32, %c0_i32_0 : i32, i32
  }
  func.func @transform_10(%arg0: i32) -> (i32, i32, i32) {
    %c0_i32 = arith.constant 0 : i32
    %c0_i32_0 = arith.constant 0 : i32
    %c0_i32_1 = arith.constant 0 : i32
    return %arg0, %c0_i32, %c0_i32_0 : i32, i32, i32
  }
}

</mosaic_0001>

<llo_original>
// kernel: idm_cotrain_forward.1
$region0: #{idm_cotrain_forward.1}
  #allocation0 [shape = 'u32[]', space=smem, size = 0x4, offset = 0x4, fixed_abs, tag = 'smem constant byte address 0x4 - core index']
  #allocation1 [shape = 'u32[72,128]{1,0:T(1,128)}', space=vmem, size = 0x9000, scoped, tag = 'internal scratch']
  %s0 = inlined_call_operand.vmem [shape: bf16[2,8,32], index: 0, kind: input, shape index: {}]
  %s1 = inlined_call_operand.vmem [shape: bf16[32,64], index: 1, kind: input, shape index: {}]
  %s2 = inlined_call_operand.vmem [shape: f32[1,64], index: 2, kind: input, shape index: {}]
  %s3 = inlined_call_operand.vmem [shape: bf16[64,128], index: 3, kind: input, shape index: {}]
  %s4 = inlined_call_operand.vmem [shape: f32[1,128], index: 4, kind: input, shape index: {}]
  %s5 = inlined_call_operand.vmem [shape: bf16[128,64], index: 5, kind: input, shape index: {}]
  %s6 = inlined_call_operand.vmem [shape: bf16[128,64], index: 6, kind: input, shape index: {}]
  %s7 = inlined_call_operand.vmem [shape: f32[1,64], index: 7, kind: input, shape index: {}]
  %s8 = inlined_call_operand.vmem [shape: bf16[64,128], index: 8, kind: input, shape index: {}]
  %s9 = inlined_call_operand.vmem [shape: f32[1,128], index: 9, kind: input, shape index: {}]
  %s10 = inlined_call_operand.vmem [shape: f32[2,8,128], index: 10, kind: output, shape index: {}]
  %s11 = sld [smem:[#allocation0]]
  $region73: #{idm_cotrain_forward.1} parent=0
    _
  %s13 = ssub.s32 1, %s11
  %s14 = scalar_select 0, %s13, %s11
  loop: start=0, step=1, limit=4
  $region2: #{idm_cotrain_forward.1} parent=0 // loop_pre_header
    _
  $region3: #{idm_cotrain_forward.1} parent=0 // loop_header
    %s16 = sphi 0, %s20
    %p17 = scmp.ge.s32.totalorder %s16, 4
    %s26 = sphi 0, %s28
    %s29 = sphi 0, %s26
    %s30 = sphi 0, %s29
    %s46 = sphi 0, %s30
    %s50 = sphi 0, %s50
    %s52 = sphi 0, %s50
    %s53 = sphi 0, %s52
    %s67 = sphi 0, %s53
    %s71 = sphi 0, %s71
    %s73 = sphi 0, %s71
    %s74 = sphi 0, %s73
    %s88 = sphi 0, %s74
    %s92 = sphi 0, %s92
    %s94 = sphi 0, %s92
    %s95 = sphi 0, %s94
    %s109 = sphi 0, %s95
    %s113 = sphi 0, %s113
    %s115 = sphi 0, %s113
    %s116 = sphi 0, %s115
    %s130 = sphi 0, %s116
    %s134 = sphi 0, %s134
    %s136 = sphi 0, %s134
    %s137 = sphi 0, %s136
    %s151 = sphi 0, %s137
    %s155 = sphi 0, %s155
    %s157 = sphi 0, %s155
    %s158 = sphi 0, %s157
    %s172 = sphi 0, %s158
    %s176 = sphi 0, %s176
    %s178 = sphi 0, %s176
    %s179 = sphi 0, %s178
    %s193 = sphi 0, %s179
    %s197 = sphi 0, %s197
    %s199 = sphi 0, %s197
    %s200 = sphi 0, %s199
    %s214 = sphi 0, %s200
    %s218 = sphi 0, %s218
    %s220 = sphi 0, %s218
    %s221 = sphi 0, %s220
    %s235 = sphi 0, %s221
    %s241 = sphi 0, %s243
    %s244 = sphi 0, %s241
    %s245 = sphi 0, %s244
    %s261 = sphi 0, %s245
  $region4: #{idm_cotrain_forward.1} parent=0 // loop_header_branch
    %19 = sbr.rel (%p17) target = $region8
  $region5: #{idm_cotrain_forward.1} parent=0 // loop_body
    %s21 = ssub.s32 %s16, 1
    %s22 = ssub.s32 %s16, 2
    %s23 = sadd.s32 %s16, 1
    %s24 = ssub.s32 %s16, %s23
    %p25 = scmp.eq.s32.totalorder %s24, 0
    %s27 = sadd.s32 %s26, 1
    %s28 = scalar_select %p25, %s26, %s27
    %p31 = pneg %p25
    %p32 = scmp.eq.s32.totalorder %s16, 1
    %p33 = por %p31, %p32
    %p34 = scmp.ne.s32.totalorder %s26, %s29
    %p35 = scmp.eq.s32.totalorder %s16, 0
    %p36 = por %p34, %p35
    %p37 = scmp.ne.s32.totalorder %s26, %s29
    %p38 = scmp.eq.s32.totalorder %s21, 1
    %p39 = por %p37, %p38
    %p40 = scmp.ne.s32.totalorder %s29, %s30
    %p41 = scmp.eq.s32.totalorder %s21, 0
    %p42 = por %p40, %p41
    %p43 = scmp.ne.s32.totalorder %s29, %s30
    %p44 = scmp.eq.s32.totalorder %s22, 1
    %p45 = por %p43, %p44
    %p47 = scmp.ne.s32.totalorder %s30, %s46
    %p48 = scmp.eq.s32.totalorder %s22, 0
    %p49 = por %p47, %p48
    %s51 = sadd.s32 %s50, 1
    %p54 = scmp.eq.s32.totalorder %s16, 1
    %p55 = scmp.ne.s32.totalorder %s50, %s52
    %p56 = scmp.eq.s32.totalorder %s16, 0
    %p57 = por %p55, %p56
    %p58 = scmp.ne.s32.totalorder %s50, %s52
    %p59 = scmp.eq.s32.totalorder %s21, 1
    %p60 = por %p58, %p59
    %p61 = scmp.ne.s32.totalorder %s52, %s53
    %p62 = scmp.eq.s32.totalorder %s21, 0
    %p63 = por %p61, %p62
    %p64 = scmp.ne.s32.totalorder %s52, %s53
    %p65 = scmp.eq.s32.totalorder %s22, 1
    %p66 = por %p64, %p65
    %p68 = scmp.ne.s32.totalorder %s53, %s67
    %p69 = scmp.eq.s32.totalorder %s22, 0
    %p70 = por %p68, %p69
    %s72 = sadd.s32 %s71, 1
    %p75 = scmp.eq.s32.totalorder %s16, 1
    %p76 = scmp.ne.s32.totalorder %s71, %s73
    %p77 = scmp.eq.s32.totalorder %s16, 0
    %p78 = por %p76, %p77
    %p79 = scmp.ne.s32.totalorder %s71, %s73
    %p80 = scmp.eq.s32.totalorder %s21, 1
    %p81 = por %p79, %p80
    %p82 = scmp.ne.s32.totalorder %s73, %s74
    %p83 = scmp.eq.s32.totalorder %s21, 0
    %p84 = por %p82, %p83
    %p85 = scmp.ne.s32.totalorder %s73, %s74
    %p86 = scmp.eq.s32.totalorder %s22, 1
    %p87 = por %p85, %p86
    %p89 = scmp.ne.s32.totalorder %s74, %s88
    %p90 = scmp.eq.s32.totalorder %s22, 0
    %p91 = por %p89, %p90
    %s93 = sadd.s32 %s92, 1
    %p96 = scmp.eq.s32.totalorder %s16, 1
    %p97 = scmp.ne.s32.totalorder %s92, %s94
    %p98 = scmp.eq.s32.totalorder %s16, 0
    %p99 = por %p97, %p98
    %p100 = scmp.ne.s32.totalorder %s92, %s94
    %p101 = scmp.eq.s32.totalorder %s21, 1
    %p102 = por %p100, %p101
    %p103 = scmp.ne.s32.totalorder %s94, %s95
    %p104 = scmp.eq.s32.totalorder %s21, 0
    %p105 = por %p103, %p104
    %p106 = scmp.ne.s32.totalorder %s94, %s95
    %p107 = scmp.eq.s32.totalorder %s22, 1
    %p108 = por %p106, %p107
    %p110 = scmp.ne.s32.totalorder %s95, %s109
    %p111 = scmp.eq.s32.totalorder %s22, 0
    %p112 = por %p110, %p111
    %s114 = sadd.s32 %s113, 1
    %p117 = scmp.eq.s32.totalorder %s16, 1
    %p118 = scmp.ne.s32.totalorder %s113, %s115
    %p119 = scmp.eq.s32.totalorder %s16, 0
    %p120 = por %p118, %p119
    %p121 = scmp.ne.s32.totalorder %s113, %s115
    %p122 = scmp.eq.s32.totalorder %s21, 1
    %p123 = por %p121, %p122
    %p124 = scmp.ne.s32.totalorder %s115, %s116
    %p125 = scmp.eq.s32.totalorder %s21, 0
    %p126 = por %p124, %p125
    %p127 = scmp.ne.s32.totalorder %s115, %s116
    %p128 = scmp.eq.s32.totalorder %s22, 1
    %p129 = por %p127, %p128
    %p131 = scmp.ne.s32.totalorder %s116, %s130
    %p132 = scmp.eq.s32.totalorder %s22, 0
    %p133 = por %p131, %p132
    %s135 = sadd.s32 %s134, 1
    %p138 = scmp.eq.s32.totalorder %s16, 1
    %p139 = scmp.ne.s32.totalorder %s134, %s136
    %p140 = scmp.eq.s32.totalorder %s16, 0
    %p141 = por %p139, %p140
    %p142 = scmp.ne.s32.totalorder %s134, %s136
    %p143 = scmp.eq.s32.totalorder %s21, 1
    %p144 = por %p142, %p143
    %p145 = scmp.ne.s32.totalorder %s136, %s137
    %p146 = scmp.eq.s32.totalorder %s21, 0
    %p147 = por %p145, %p146
    %p148 = scmp.ne.s32.totalorder %s136, %s137
    %p149 = scmp.eq.s32.totalorder %s22, 1
    %p150 = por %p148, %p149
    %p152 = scmp.ne.s32.totalorder %s137, %s151
    %p153 = scmp.eq.s32.totalorder %s22, 0
    %p154 = por %p152, %p153
    %s156 = sadd.s32 %s155, 1
    %p159 = scmp.eq.s32.totalorder %s16, 1
    %p160 = scmp.ne.s32.totalorder %s155, %s157
    %p161 = scmp.eq.s32.totalorder %s16, 0
    %p162 = por %p160, %p161
    %p163 = scmp.ne.s32.totalorder %s155, %s157
    %p164 = scmp.eq.s32.totalorder %s21, 1
    %p165 = por %p163, %p164
    %p166 = scmp.ne.s32.totalorder %s157, %s158
    %p167 = scmp.eq.s32.totalorder %s21, 0
    %p168 = por %p166, %p167
    %p169 = scmp.ne.s32.totalorder %s157, %s158
    %p170 = scmp.eq.s32.totalorder %s22, 1
    %p171 = por %p169, %p170
    %p173 = scmp.ne.s32.totalorder %s158, %s172
    %p174 = scmp.eq.s32.totalorder %s22, 0
    %p175 = por %p173, %p174
    %s177 = sadd.s32 %s176, 1
    %p180 = scmp.eq.s32.totalorder %s16, 1
    %p181 = scmp.ne.s32.totalorder %s176, %s178
    %p182 = scmp.eq.s32.totalorder %s16, 0
    %p183 = por %p181, %p182
    %p184 = scmp.ne.s32.totalorder %s176, %s178
    %p185 = scmp.eq.s32.totalorder %s21, 1
    %p186 = por %p184, %p185
    %p187 = scmp.ne.s32.totalorder %s178, %s179
    %p188 = scmp.eq.s32.totalorder %s21, 0
    %p189 = por %p187, %p188
    %p190 = scmp.ne.s32.totalorder %s178, %s179
    %p191 = scmp.eq.s32.totalorder %s22, 1
    %p192 = por %p190, %p191
    %p194 = scmp.ne.s32.totalorder %s179, %s193
    %p195 = scmp.eq.s32.totalorder %s22, 0
    %p196 = por %p194, %p195
    %s198 = sadd.s32 %s197, 1
    %p201 = scmp.eq.s32.totalorder %s16, 1
    %p202 = scmp.ne.s32.totalorder %s197, %s199
    %p203 = scmp.eq.s32.totalorder %s16, 0
    %p204 = por %p202, %p203
    %p205 = scmp.ne.s32.totalorder %s197, %s199
    %p206 = scmp.eq.s32.totalorder %s21, 1
    %p207 = por %p205, %p206
    %p208 = scmp.ne.s32.totalorder %s199, %s200
    %p209 = scmp.eq.s32.totalorder %s21, 0
    %p210 = por %p208, %p209
    %p211 = scmp.ne.s32.totalorder %s199, %s200
    %p212 = scmp.eq.s32.totalorder %s22, 1
    %p213 = por %p211, %p212
    %p215 = scmp.ne.s32.totalorder %s200, %s214
    %p216 = scmp.eq.s32.totalorder %s22, 0
    %p217 = por %p215, %p216
    %s219 = sadd.s32 %s218, 1
    %p222 = scmp.eq.s32.totalorder %s16, 1
    %p223 = scmp.ne.s32.totalorder %s218, %s220
    %p224 = scmp.eq.s32.totalorder %s16, 0
    %p225 = por %p223, %p224
    %p226 = scmp.ne.s32.totalorder %s218, %s220
    %p227 = scmp.eq.s32.totalorder %s21, 1
    %p228 = por %p226, %p227
    %p229 = scmp.ne.s32.totalorder %s220, %s221
    %p230 = scmp.eq.s32.totalorder %s21, 0
    %p231 = por %p229, %p230
    %p232 = scmp.ne.s32.totalorder %s220, %s221
    %p233 = scmp.eq.s32.totalorder %s22, 1
    %p234 = por %p232, %p233
    %p236 = scmp.ne.s32.totalorder %s221, %s235
    %p237 = scmp.eq.s32.totalorder %s22, 0
    %p238 = por %p236, %p237
    %s239 = ssub.s32 %s16, %s23
    %p240 = scmp.eq.s32.totalorder %s239, 0
    %s242 = sadd.s32 %s241, 1
    %s243 = scalar_select %p240, %s241, %s242
    %p246 = pneg %p240
    %p247 = scmp.eq.s32.totalorder %s16, 1
    %p248 = por %p246, %p247
    %p249 = scmp.ne.s32.totalorder %s241, %s244
    %p250 = scmp.eq.s32.totalorder %s16, 0
    %p251 = por %p249, %p250
    %p252 = scmp.ne.s32.totalorder %s241, %s244
    %p253 = scmp.eq.s32.totalorder %s21, 1
    %p254 = por %p252, %p253
    %p255 = scmp.ne.s32.totalorder %s244, %s245
    %p256 = scmp.eq.s32.totalorder %s21, 0
    %p257 = por %p255, %p256
    %p258 = scmp.ne.s32.totalorder %s244, %s245
    %p259 = scmp.eq.s32.totalorder %s22, 1
    %p260 = por %p258, %p259
    %p262 = scmp.ne.s32.totalorder %s245, %s261
    %p263 = scmp.eq.s32.totalorder %s22, 0
    %p264 = por %p262, %p263
    %p265 = scmp.le.s32.totalorder 1, %s16
    %p266 = scmp.lt.s32.totalorder %s16, 3
    %p267 = pnand %p265, %p266
    %p268 = pneg %p267
    // Predicated region
    $region9: #{idm_cotrain_forward.1} parent=5 // pred_check
      _
    $region10: #{idm_cotrain_forward.1} parent=5 // pred_check_branch
      %270 = sbr.rel (%p267) target = $region12
    $region11: #{idm_cotrain_forward.1} parent=5 // pred_region
      %s271 = ssub.s32 %s16, 1
      // Predicated region
      $region13: #{idm_cotrain_forward.1} parent=11 // pred_check
        %p272 = pneg %p63
      $region14: #{idm_cotrain_forward.1} parent=11 // pred_check_branch
        %274 = sbr.rel (%p272) target = $region16
      $region15: #{idm_cotrain_forward.1} parent=11 // pred_region
        _
      $region16: #{idm_cotrain_forward.1} parent=11 // pred_fallthru
        _
      // Predicated region
      $region17: #{idm_cotrain_forward.1} parent=11 // pred_check
        %p275 = pneg %p84
      $region18: #{idm_cotrain_forward.1} parent=11 // pred_check_branch
        %277 = sbr.rel (%p275) target = $region20
      $region19: #{idm_cotrain_forward.1} parent=11 // pred_region
        _
      $region20: #{idm_cotrain_forward.1} parent=11 // pred_fallthru
        _
      // Predicated region
      $region21: #{idm_cotrain_forward.1} parent=11 // pred_check
        %p278 = pneg %p105
      $region22: #{idm_cotrain_forward.1} parent=11 // pred_check_branch
        %280 = sbr.rel (%p278) target = $region24
      $region23: #{idm_cotrain_forward.1} parent=11 // pred_region
        _
      $region24: #{idm_cotrain_forward.1} parent=11 // pred_fallthru
        _
      // Predicated region
      $region25: #{idm_cotrain_forward.1} parent=11 // pred_check
        %p281 = pneg %p126
      $region26: #{idm_cotrain_forward.1} parent=11 // pred_check_branch
        %283 = sbr.rel (%p281) target = $region28
      $region27: #{idm_cotrain_forward.1} parent=11 // pred_region
        _
      $region28: #{idm_cotrain_forward.1} parent=11 // pred_fallthru
        _
      // Predicated region
      $region29: #{idm_cotrain_forward.1} parent=11 // pred_check
        %p284 = pneg %p147
      $region30: #{idm_cotrain_forward.1} parent=11 // pred_check_branch
        %286 = sbr.rel (%p284) target = $region32
      $region31: #{idm_cotrain_forward.1} parent=11 // pred_region
        _
      $region32: #{idm_cotrain_forward.1} parent=11 // pred_fallthru
        _
      // Predicated region
      $region33: #{idm_cotrain_forward.1} parent=11 // pred_check
        %p287 = pneg %p168
      $region34: #{idm_cotrain_forward.1} parent=11 // pred_check_branch
        %289 = sbr.rel (%p287) target = $region36
      $region35: #{idm_cotrain_forward.1} parent=11 // pred_region
        _
      $region36: #{idm_cotrain_forward.1} parent=11 // pred_fallthru
        _
      // Predicated region
      $region37: #{idm_cotrain_forward.1} parent=11 // pred_check
        %p290 = pneg %p189
      $region38: #{idm_cotrain_forward.1} parent=11 // pred_check_branch
        %292 = sbr.rel (%p290) target = $region40
      $region39: #{idm_cotrain_forward.1} parent=11 // pred_region
        _
      $region40: #{idm_cotrain_forward.1} parent=11 // pred_fallthru
        _
      // Predicated region
      $region41: #{idm_cotrain_forward.1} parent=11 // pred_check
        %p293 = pneg %p210
      $region42: #{idm_cotrain_forward.1} parent=11 // pred_check_branch
        %295 = sbr.rel (%p293) target = $region44
      $region43: #{idm_cotrain_forward.1} parent=11 // pred_region
        _
      $region44: #{idm_cotrain_forward.1} parent=11 // pred_fallthru
        _
      // Predicated region
      $region45: #{idm_cotrain_forward.1} parent=11 // pred_check
        %p296 = pneg %p231
      $region46: #{idm_cotrain_forward.1} parent=11 // pred_check_branch
        %298 = sbr.rel (%p296) target = $region48
      $region47: #{idm_cotrain_forward.1} parent=11 // pred_region
        _
      $region48: #{idm_cotrain_forward.1} parent=11 // pred_fallthru
        _
    $region12: #{idm_cotrain_forward.1} parent=5 // pred_fallthru
      _
    %p299 = scmp.lt.s32.totalorder %s16, 2
    // Predicated region
    $region49: #{idm_cotrain_forward.1} parent=5 // pred_check
      %p300 = pneg %p299
    $region50: #{idm_cotrain_forward.1} parent=5 // pred_check_branch
      %302 = sbr.rel (%p300) target = $region52
    $region51: #{idm_cotrain_forward.1} parent=5 // pred_region
      // Predicated region
      $region53: #{idm_cotrain_forward.1} parent=51 // pred_check
        %p303 = pneg %p36
      $region54: #{idm_cotrain_forward.1} parent=51 // pred_check_branch
        %305 = sbr.rel (%p303) target = $region56
      $region55: #{idm_cotrain_forward.1} parent=51 // pred_region
        %p306 = scmp.lt.s32.totalorder %s16, 1
        %s307 = scalar_select %p306, %s16, 1
        %s308 = smul.addr %s307, 4
        %s309 = scalar_lea.vmem %s0, %s308
      $region56: #{idm_cotrain_forward.1} parent=51 // pred_fallthru
        _
    $region52: #{idm_cotrain_forward.1} parent=5 // pred_fallthru
      _
    %p310 = scmp.le.s32.totalorder 1, %s16
    %p311 = scmp.lt.s32.totalorder %s16, 3
    %p312 = pnand %p310, %p311
    %p313 = pneg %p312
    // Predicated region
    $region57: #{idm_cotrain_forward.1} parent=5 // pred_check
      _
    $region58: #{idm_cotrain_forward.1} parent=5 // pred_check_branch
      %315 = sbr.rel (%p312) target = $region60
    $region59: #{idm_cotrain_forward.1} parent=5 // pred_region
      %s316 = ssub.s32 %s16, 1
      %p317 = scmp.lt.s32.totalorder %s21, 1
      %s318 = scalar_select %p317, %s21, 1
      %s319 = smul.addr %s318, 4
      %s320 = scalar_lea.vmem %s0, %s319
      %p321 = pneg %p42
      %p322 = pneg %p39
      %p323 = pneg %p63
      %p324 = pneg %p60
      %p325 = pneg %p84
      %p326 = pneg %p81
      %p327 = pneg %p105
      %p328 = pneg %p102
      %p329 = pneg %p126
      %p330 = pneg %p123
      %p331 = pneg %p147
      %p332 = pneg %p144
      %p333 = pneg %p168
      %p334 = pneg %p165
      %p335 = pneg %p189
      %p336 = pneg %p186
      %p337 = pneg %p210
      %p338 = pneg %p207
      %p339 = pneg %p231
      %p340 = pneg %p228
      %p341 = pneg %p257
      %p342 = pneg %p254
      %p343 = scmp.lt.s32.totalorder %s21, 1
      %s344 = scalar_select %p343, %s21, 1
      %s345 = smul.addr %s344, 8
      %s346 = scalar_lea.vmem %s10, %s345
      %p347 = scmp.lt.s32.totalorder %s21, 1
      %s348 = scalar_select %p347, %s21, 1
      %s349 = smul.addr %s348, 4
      %s350 = scalar_lea.vmem %s0, %s349
      %p351 = scmp.lt.s32.totalorder %s21, 1
      %s352 = scalar_select %p351, %s21, 1
      %s353 = smul.addr %s352, 8
      %s354 = scalar_lea.vmem %s10, %s353
      %v356 = vld [vmem:[%s350] sm:$0xf]
      %v357 = vld [vmem:[%s1] sm:$0xf]
      %v358 = vld [vmem:[%s1 + $0x4] sm:$0xf]
      %v359 = vld [vmem:[%s1 + $0x8] sm:$0xf]
      %v360 = vld [vmem:[%s1 + $0xc] sm:$0xf]
      %v361 = vld [vmem:[%s2] sm:$0x1]
      %v363 = vperm.slane %v361, 0
      %v369 = vunpack.c.l.b16 %v357
      %v370 = vunpack.c.l.b16 %v358
      %v371 = vunpack.c.l.b16 %v359
      %v372 = vunpack.c.l.b16 %v360
      %v373 = vpack.c.b16 %v370, %v369
      %v374 = vpack.c.b16 %v372, %v371
      %vm377 = vcmask 261120
      %v379 = vsel %vm377, %v356, 0
      %381 = vmatpush.bf16.msra.mxu0 0
      %382 = vmatpush.bf16.msra.mxu0 0
      %383 = vmatpush.bf16.msra.mxu0 0
      %384 = vmatpush.bf16.msra.mxu0 0
      %385 = vmatpush.bf16.msra.mxu0 0
      %386 = vmatpush.bf16.msra.mxu0 0
      %387 = vmatpush.bf16.msra.mxu0 %v374
      %388 = vmatpush.bf16.msra.mxu0 %v373
      %389 = vmatmul.bf16.gmra.mxu0 %v379
      %v390 = vpop.f32.mrf.mxu0
      %v391 = vadd.f32 %v363, %v390
      %v392 = vpop.f32.mrf.mxu0
      %393 = vdwg.mxu0
      %v394 = vmax.f32 %v391, 0.0
      %v395 = vpack.c.bf16 %v394, %v394
      %v396 = vld [vmem:[%s3] sm:$0xf]
      %v397 = vld [vmem:[%s3 + $0x4] sm:$0xf]
      %v398 = vld [vmem:[%s3 + $0x8] sm:$0xf]
      %v399 = vld [vmem:[%s3 + $0xc] sm:$0xf]
      %v400 = vld [vmem:[%s3 + $0x10] sm:$0xf]
      %v401 = vld [vmem:[%s3 + $0x14] sm:$0xf]
      %v402 = vld [vmem:[%s3 + $0x18] sm:$0xf]
      %v403 = vld [vmem:[%s3 + $0x1c] sm:$0xf]
      %v404 = vld [vmem:[%s4] sm:$0x1]
      %v406 = vperm.slane %v404, 0
      %v416 = vunpack.c.l.b16 %v396
      %v417 = vunpack.c.l.b16 %v397
      %v418 = vunpack.c.l.b16 %v398
      %v419 = vunpack.c.l.b16 %v399
      %v420 = vunpack.c.l.b16 %v400
      %v421 = vunpack.c.l.b16 %v401
      %v422 = vunpack.c.l.b16 %v402
      %v423 = vunpack.c.l.b16 %v403
      %v424 = vpack.c.b16 %v417, %v416
      %v425 = vpack.c.b16 %v419, %v418
      %v426 = vpack.c.b16 %v421, %v420
      %v427 = vpack.c.b16 %v423, %v422
      %vm432 = vcmask 523264
      %v434 = vsel %vm432, %v395, 0
      %436 = vmatpush.bf16.msra.mxu0 0
      %437 = vmatpush.bf16.msra.mxu0 0
      %438 = vmatpush.bf16.msra.mxu0 0
      %439 = vmatpush.bf16.msra.mxu0 0
      %440 = vmatpush.bf16.msra.mxu0 %v427
      %441 = vmatpush.bf16.msra.mxu0 %v426
      %442 = vmatpush.bf16.msra.mxu0 %v425
      %443 = vmatpush.bf16.msra.mxu0 %v424
      %444 = vmatmul.bf16.gmra.mxu0 %v434
      %v445 = vpop.f32.mrf.mxu0
      %v446 = vadd.f32 %v406, %v445
      %v447 = vpop.f32.mrf.mxu0
      %448 = vdwg.mxu0
      %v450 = vrot.slane %v446, 1
      %vm452 = vcmask 1046528
      %v453 = vsel %vm452, %v450, %v450
      %v454 = vpack.c.bf16 %v446, %v446
      %v455 = vld [vmem:[%s5] sm:$0xf]
      %v456 = vld [vmem:[%s5 + $0x4] sm:$0xf]
      %v457 = vld [vmem:[%s5 + $0x8] sm:$0xf]
      %v458 = vld [vmem:[%s5 + $0xc] sm:$0xf]
      %v459 = vld [vmem:[%s5 + $0x10] sm:$0xf]
      %v460 = vld [vmem:[%s5 + $0x14] sm:$0xf]
      %v461 = vld [vmem:[%s5 + $0x18] sm:$0xf]
      %v462 = vld [vmem:[%s5 + $0x1c] sm:$0xf]
      %v463 = vld [vmem:[%s5 + $0x20] sm:$0xf]
      %v464 = vld [vmem:[%s5 + $0x24] sm:$0xf]
      %v465 = vld [vmem:[%s5 + $0x28] sm:$0xf]
      %v466 = vld [vmem:[%s5 + $0x2c] sm:$0xf]
      %v467 = vld [vmem:[%s5 + $0x30] sm:$0xf]
      %v468 = vld [vmem:[%s5 + $0x34] sm:$0xf]
      %v469 = vld [vmem:[%s5 + $0x38] sm:$0xf]
      %v470 = vld [vmem:[%s5 + $0x3c] sm:$0xf]
      %v471 = vpack.c.bf16 %v453, %v453
      %v472 = vld [vmem:[%s6] sm:$0xf]
      %v473 = vld [vmem:[%s6 + $0x4] sm:$0xf]
      %v474 = vld [vmem:[%s6 + $0x8] sm:$0xf]
      %v475 = vld [vmem:[%s6 + $0xc] sm:$0xf]
      %v476 = vld [vmem:[%s6 + $0x10] sm:$0xf]
      %v477 = vld [vmem:[%s6 + $0x14] sm:$0xf]
      %v478 = vld [vmem:[%s6 + $0x18] sm:$0xf]
      %v479 = vld [vmem:[%s6 + $0x1c] sm:$0xf]
      %v480 = vld [vmem:[%s6 + $0x20] sm:$0xf]
      %v481 = vld [vmem:[%s6 + $0x24] sm:$0xf]
      %v482 = vld [vmem:[%s6 + $0x28] sm:$0xf]
      %v483 = vld [vmem:[%s6 + $0x2c] sm:$0xf]
      %v484 = vld [vmem:[%s6 + $0x30] sm:$0xf]
      %v485 = vld [vmem:[%s6 + $0x34] sm:$0xf]
      %v486 = vld [vmem:[%s6 + $0x38] sm:$0xf]
      %v487 = vld [vmem:[%s6 + $0x3c] sm:$0xf]
      %v504 = vunpack.c.l.b16 %v472
      %v505 = vunpack.c.l.b16 %v473
      %v506 = vunpack.c.l.b16 %v474
      %v507 = vunpack.c.l.b16 %v475
      %v508 = vunpack.c.l.b16 %v476
      %v509 = vunpack.c.l.b16 %v477
      %v510 = vunpack.c.l.b16 %v478
      %v511 = vunpack.c.l.b16 %v479
      %v512 = vunpack.c.l.b16 %v480
      %v513 = vunpack.c.l.b16 %v481
      %v514 = vunpack.c.l.b16 %v482
      %v515 = vunpack.c.l.b16 %v483
      %v516 = vunpack.c.l.b16 %v484
      %v517 = vunpack.c.l.b16 %v485
      %v518 = vunpack.c.l.b16 %v486
      %v519 = vunpack.c.l.b16 %v487
      %v520 = vpack.c.b16 %v505, %v504
      %v521 = vpack.c.b16 %v507, %v506
      %v522 = vpack.c.b16 %v509, %v508
      %v523 = vpack.c.b16 %v511, %v510
      %v524 = vpack.c.b16 %v513, %v512
      %v525 = vpack.c.b16 %v515, %v514
      %v526 = vpack.c.b16 %v517, %v516
      %v527 = vpack.c.b16 %v519, %v518
      %536 = vmatpush.bf16.msra.mxu0 %v527
      %537 = vmatpush.bf16.msra.mxu0 %v526
      %538 = vmatpush.bf16.msra.mxu0 %v525
      %539 = vmatpush.bf16.msra.mxu0 %v524
      %540 = vmatpush.bf16.msra.mxu0 %v523
      %541 = vmatpush.bf16.msra.mxu0 %v522
      %542 = vmatpush.bf16.msra.mxu0 %v521
      %543 = vmatpush.bf16.msra.mxu0 %v520
      %544 = vmatmul.bf16.gmra.mxu0 %v471
      %v545 = vpop.f32.mrf.mxu0
      %v546 = vadd.f32 0.0, %v545
      %v547 = vpop.f32.mrf.mxu0
      %548 = vdwg.mxu0
      %v565 = vunpack.c.l.b16 %v455
      %v566 = vunpack.c.l.b16 %v456
      %v567 = vunpack.c.l.b16 %v457
      %v568 = vunpack.c.l.b16 %v458
      %v569 = vunpack.c.l.b16 %v459
      %v570 = vunpack.c.l.b16 %v460
      %v571 = vunpack.c.l.b16 %v461
      %v572 = vunpack.c.l.b16 %v462
      %v573 = vunpack.c.l.b16 %v463
      %v574 = vunpack.c.l.b16 %v464
      %v575 = vunpack.c.l.b16 %v465
      %v576 = vunpack.c.l.b16 %v466
      %v577 = vunpack.c.l.b16 %v467
      %v578 = vunpack.c.l.b16 %v468
      %v579 = vunpack.c.l.b16 %v469
      %v580 = vunpack.c.l.b16 %v470
      %v581 = vpack.c.b16 %v566, %v565
      %v582 = vpack.c.b16 %v568, %v567
      %v583 = vpack.c.b16 %v570, %v569
      %v584 = vpack.c.b16 %v572, %v571
      %v585 = vpack.c.b16 %v574, %v573
      %v586 = vpack.c.b16 %v576, %v575
      %v587 = vpack.c.b16 %v578, %v577
      %v588 = vpack.c.b16 %v580, %v579
      %597 = vmatpush.bf16.msra.mxu0 %v588
      %598 = vmatpush.bf16.msra.mxu0 %v587
      %599 = vmatpush.bf16.msra.mxu0 %v586
      %600 = vmatpush.bf16.msra.mxu0 %v585
      %601 = vmatpush.bf16.msra.mxu0 %v584
      %602 = vmatpush.bf16.msra.mxu0 %v583
      %603 = vmatpush.bf16.msra.mxu0 %v582
      %604 = vmatpush.bf16.msra.mxu0 %v581
      %605 = vmatmul.bf16.gmra.mxu0 %v454
      %v606 = vpop.f32.mrf.mxu0
      %v607 = vadd.f32 %v546, %v606
      %v608 = vpop.f32.mrf.mxu0
      %609 = vdwg.mxu0
      %v610 = vld [vmem:[%s7] sm:$0x1]
      %v612 = vperm.slane %v610, 0
      %v614 = vadd.f32 %v607, %v612
      %v615 = vmax.f32 %v614, 0.0
      %v616 = vpack.c.bf16 %v615, %v615
      %v617 = vld [vmem:[%s8] sm:$0xf]
      %v618 = vld [vmem:[%s8 + $0x4] sm:$0xf]
      %v619 = vld [vmem:[%s8 + $0x8] sm:$0xf]
      %v620 = vld [vmem:[%s8 + $0xc] sm:$0xf]
      %v621 = vld [vmem:[%s8 + $0x10] sm:$0xf]
      %v622 = vld [vmem:[%s8 + $0x14] sm:$0xf]
      %v623 = vld [vmem:[%s8 + $0x18] sm:$0xf]
      %v624 = vld [vmem:[%s8 + $0x1c] sm:$0xf]
      %v625 = vld [vmem:[%s9] sm:$0x1]
      %v627 = vperm.slane %v625, 0
      %v637 = vunpack.c.l.b16 %v617
      %v638 = vunpack.c.l.b16 %v618
      %v639 = vunpack.c.l.b16 %v619
      %v640 = vunpack.c.l.b16 %v620
      %v641 = vunpack.c.l.b16 %v621
      %v642 = vunpack.c.l.b16 %v622
      %v643 = vunpack.c.l.b16 %v623
      %v644 = vunpack.c.l.b16 %v624
      %v645 = vpack.c.b16 %v638, %v637
      %v646 = vpack.c.b16 %v640, %v639
      %v647 = vpack.c.b16 %v642, %v641
      %v648 = vpack.c.b16 %v644, %v643
      %v654 = vsel %vm432, %v616, 0
      %656 = vmatpush.bf16.msra.mxu0 0
      %657 = vmatpush.bf16.msra.mxu0 0
      %658 = vmatpush.bf16.msra.mxu0 0
      %659 = vmatpush.bf16.msra.mxu0 0
      %660 = vmatpush.bf16.msra.mxu0 %v648
      %661 = vmatpush.bf16.msra.mxu0 %v647
      %662 = vmatpush.bf16.msra.mxu0 %v646
      %663 = vmatpush.bf16.msra.mxu0 %v645
      %664 = vmatmul.bf16.gmra.mxu0 %v654
      %v665 = vpop.f32.mrf.mxu0
      %v666 = vadd.f32 %v627, %v665
      %v667 = vpop.f32.mrf.mxu0
      %668 = vdwg.mxu0
      %v669 = vtanh.pop %v666
      %v670 = vadd.f32 %v446, %v669
      %671 = vst [vmem:[%s354] sm:$0xff] %v670
      %p672 = scmp.lt.s32.totalorder %s21, 1
      %s673 = scalar_select %p672, %s21, 1
      %s674 = smul.addr %s673, 8
      %s675 = scalar_lea.vmem %s10, %s674
      // Predicated region
      $region61: #{idm_cotrain_forward.1} parent=59 // pred_check
        %p676 = pneg %p254
      $region62: #{idm_cotrain_forward.1} parent=59 // pred_check_branch
        %678 = sbr.rel (%p676) target = $region64
      $region63: #{idm_cotrain_forward.1} parent=59 // pred_region
        _
      $region64: #{idm_cotrain_forward.1} parent=59 // pred_fallthru
        _
    $region60: #{idm_cotrain_forward.1} parent=5 // pred_fallthru
      _
    %p679 = scmp.le.s32.totalorder 2, %s16
    // Predicated region
    $region65: #{idm_cotrain_forward.1} parent=5 // pred_check
      %p680 = pneg %p679
    $region66: #{idm_cotrain_forward.1} parent=5 // pred_check_branch
      %682 = sbr.rel (%p680) target = $region68
    $region67: #{idm_cotrain_forward.1} parent=5 // pred_region
      %s683 = ssub.s32 %s16, 2
      // Predicated region
      $region69: #{idm_cotrain_forward.1} parent=67 // pred_check
        %p684 = pneg %p260
      $region70: #{idm_cotrain_forward.1} parent=67 // pred_check_branch
        %686 = sbr.rel (%p684) target = $region72
      $region71: #{idm_cotrain_forward.1} parent=67 // pred_region
        %p687 = scmp.lt.s32.totalorder %s22, 1
        %s688 = scalar_select %p687, %s22, 1
        %s689 = smul.addr %s688, 8
        %s690 = scalar_lea.vmem %s10, %s689
      $region72: #{idm_cotrain_forward.1} parent=67 // pred_fallthru
        _
    $region68: #{idm_cotrain_forward.1} parent=5 // pred_fallthru
      _
  $region6: #{idm_cotrain_forward.1} parent=0 // loop_footer
    %s20 = sadd.s32 1, %s16
  $region7: #{idm_cotrain_forward.1} parent=0 // loop_footer_branch
    %15 = sbr.rel target = $region3
  $region8: #{idm_cotrain_forward.1} parent=0 // loop_exit
    _

</llo_original>
